<compile_context>
chip_gen: v6e
topology: v6e:2x2x1
jax: 0.10.0
libtpu: 0.0.40
codegen_flags: <defaults>
</compile_context>

<pallas_src>
import functools

import jax
import jax.numpy as jnp
from jax.experimental import pallas as pl
from jax.experimental.pallas import tpu as pltpu


def _round_up(x, m):
    return (x + m - 1) // m * m


def _mlp_clamp_kernel(x_ref, w1_ref, b1_ref, w2_ref, b2_ref, o_ref,
                      *, min_val, max_val, compute_dtype):
    x = x_ref[...]
    if compute_dtype is not None:
        # Cast the activation tile in VMEM (no extra HBM pass in the wrapper).
        x = x.astype(compute_dtype)
    # linear1: (TB, D_IN) @ (D_IN, D_HID) + (1, D_HID)   [f32 accumulate]
    v1 = jnp.dot(x, w1_ref[...],
                 preferred_element_type=jnp.float32) + b1_ref[...]
    # clamp(min=min_val) then clamp(max=max_val) — same order as torch.clamp calls
    v2 = jnp.maximum(v1, min_val)
    v3 = jnp.minimum(v2, max_val)
    # linear2: (TB, D_HID) @ (D_HID, D_OUT) + (1, D_OUT)
    v4 = jnp.dot(v3.astype(w2_ref.dtype), w2_ref[...],
                 preferred_element_type=jnp.float32) + b2_ref[...]
    o_ref[...] = v4.astype(o_ref.dtype)


def model_forward(x, w1_t, b1, w2_t, b2, *, min_val=1.0, max_val=1.0,
                  block_b=2048, compute_dtype=None, out_dtype=None):
    """Fused Linear -> clamp(min) -> clamp(max) -> Linear.

    x:    (B, 128) activations (f32)
    w1_t: (128, 128)  — transpose of PyTorch linear1.weight
    b1:   (128,) or (1, 128)
    w2_t: (128, 64)   — transpose of PyTorch linear2.weight
    b2:   (64,) or (1, 64)
    compute_dtype: optional (e.g. jnp.bfloat16) MXU input dtype; accumulation,
                   bias add and clamp stay f32. Changes numerics slightly.
    out_dtype:     optional output dtype (e.g. jnp.bfloat16) to halve output
                   HBM writes when the consumer tolerates it.
    """
    if out_dtype is None:
        out_dtype = x.dtype
    B, d_in = x.shape
    d_hid = w1_t.shape[1]
    d_out = w2_t.shape[1]

    # Only the (tiny, constant) weights are cast in the wrapper; x is cast
    # per-tile inside the kernel to avoid an extra un-fused HBM pass.
    if compute_dtype is not None:
        w1_t = w1_t.astype(compute_dtype)
        w2_t = w2_t.astype(compute_dtype)

    b1 = b1.reshape(1, d_hid).astype(jnp.float32)
    b2 = b2.reshape(1, d_out).astype(jnp.float32)

    # Batch tile: split B into cdiv(B, block_b) near-equal tiles so a small
    # remainder never pads the batch up by a whole extra block. Sublane
    # multiple is 16 for 16-bit compute dtypes, else 8.
    sub = 16 if (compute_dtype is not None and
                 jnp.dtype(compute_dtype).itemsize == 2) else 8
    n_tiles = max(1, pl.cdiv(B, block_b))
    tb = _round_up(pl.cdiv(B, n_tiles), sub)
    B_p = _round_up(B, tb)
    if B_p != B:
        x = jnp.pad(x, ((0, B_p - B), (0, 0)))

    grid = (B_p // tb,)

    # Estimated double-buffered VMEM footprint; raise the scoped limit only
    # when it would exceed the smallest (v5e, 16 MiB) default.
    x_tile_bytes = tb * d_in * x.dtype.itemsize
    o_tile_bytes = tb * d_out * jnp.dtype(out_dtype).itemsize
    w_bytes = (d_in * d_hid + d_hid * d_out) * w1_t.dtype.itemsize
    est_vmem = 2 * (x_tile_bytes + o_tile_bytes + w_bytes) + (1 << 20)
    compiler_kwargs = dict(dimension_semantics=("parallel",))
    if est_vmem > (14 << 20):
        compiler_kwargs["vmem_limit_bytes"] = int(min(est_vmem * 3 // 2, 48 << 20))

    out = pl.pallas_call(
        functools.partial(_mlp_clamp_kernel,
                          min_val=float(min_val), max_val=float(max_val),
                          compute_dtype=compute_dtype),
        out_shape=jax.ShapeDtypeStruct((B_p, d_out), out_dtype),
        grid=grid,
        in_specs=[
            pl.BlockSpec((tb, d_in), lambda i: (i, 0)),       # x tile
            pl.BlockSpec((d_in, d_hid), lambda i: (0, 0)),    # w1 (VMEM-resident)
            pl.BlockSpec((1, d_hid), lambda i: (0, 0)),       # b1
            pl.BlockSpec((d_hid, d_out), lambda i: (0, 0)),   # w2
            pl.BlockSpec((1, d_out), lambda i: (0, 0)),       # b2
        ],
        # True (tb, 64) output block — 64 equals the full last dim, so no pad
        # bytes or wrapper column-slice pass are ever written to HBM.
        out_specs=pl.BlockSpec((tb, d_out), lambda i: (i, 0)),
        compiler_params=pltpu.CompilerParams(**compiler_kwargs),
    )(x, w1_t, b1, w2_t, b2)

    # Undo batch padding only if any was added.
    return out[:B] if B_p != B else out


if __name__ == "__main__":
    key = jax.random.PRNGKey(0)
    k_x, k_w1, k_b1, k_w2, k_b2 = jax.random.split(key, 5)

    # Small shapes consistent with the module (Linear(128,128) -> Linear(128,64)).
    B, D_IN, D_HID, D_OUT = 8, 128, 128, 64
    MIN_VAL = 1.0   # module's min_value
    MAX_VAL = 1.0   # module's max_value

    x = jax.random.normal(k_x, (B, D_IN), dtype=jnp.float32)

    # Deterministic parameter init (PyTorch Linear-like uniform bounds),
    # stored as (in, out) = transpose of PyTorch's (out, in) weight layout.
    bound1 = 1.0 / (D_IN ** 0.5)
    bound2 = 1.0 / (D_HID ** 0.5)
    w1_t = jax.random.uniform(k_w1, (D_IN, D_HID), jnp.float32, -bound1, bound1)
    b1 = jax.random.uniform(k_b1, (1, D_HID), jnp.float32, -bound1, bound1)
    w2_t = jax.random.uniform(k_w2, (D_HID, D_OUT), jnp.float32, -bound2, bound2)
    b2 = jax.random.uniform(k_b2, (1, D_OUT), jnp.float32, -bound2, bound2)

    out = model_forward(x, w1_t, b1, w2_t, b2,
                        min_val=MIN_VAL, max_val=MAX_VAL)
    out = jax.block_until_ready(out)

    # Reference check in plain JAX (f32, same semantics as the PyTorch module).
    v1 = x @ w1_t + b1
    v3 = jnp.minimum(jnp.maximum(v1, MIN_VAL), MAX_VAL)
    ref = v3 @ w2_t + b2
    assert out.shape == (B, D_OUT)
    assert jnp.allclose(out, ref, atol=1e-4, rtol=1e-5), "mismatch vs reference"

    print("KERNEL_OK")
</pallas_src>

<mosaic_0001>
module attributes {stable_mosaic.version = 11 : i64} {
  func.func @_mlp_clamp_kernel(%arg0: i32, %arg1: memref<8x128xf32, #tpu.memory_space<vmem>>, %arg2: memref<128x128xf32, #tpu.memory_space<vmem>>, %arg3: memref<1x128xf32, #tpu.memory_space<vmem>>, %arg4: memref<128x64xf32, #tpu.memory_space<vmem>>, %arg5: memref<1x64xf32, #tpu.memory_space<vmem>>, %arg6: memref<8x64xf32, #tpu.memory_space<vmem>>) attributes {dimension_semantics = [#tpu.dimension_semantics<parallel>], iteration_bounds = array<i64: 1>, scalar_prefetch = 0 : i64, scratch_operands = 0 : i64, tpu.core_type = #tpu.core_type<tc>, window_params = [{transform_indices = @transform_0, window_bounds = array<i64: 8, 128>}, {pipeline_mode = #tpu.pipeline_mode<synchronous>, transform_indices = @transform_1, window_bounds = array<i64: 128, 128>}, {pipeline_mode = #tpu.pipeline_mode<synchronous>, transform_indices = @transform_2, window_bounds = array<i64: 1, 128>}, {pipeline_mode = #tpu.pipeline_mode<synchronous>, transform_indices = @transform_3, window_bounds = array<i64: 128, 64>}, {pipeline_mode = #tpu.pipeline_mode<synchronous>, transform_indices = @transform_4, window_bounds = array<i64: 1, 64>}, {transform_indices = @transform_5, window_bounds = array<i64: 8, 64>}]} {
    %c0 = arith.constant 0 : index
    %c0_0 = arith.constant 0 : index
    %0 = vector.load %arg1[%c0, %c0_0] : memref<8x128xf32, #tpu.memory_space<vmem>>, vector<8x128xf32>
    %c0_1 = arith.constant 0 : index
    %c0_2 = arith.constant 0 : index
    %1 = vector.load %arg2[%c0_1, %c0_2] : memref<128x128xf32, #tpu.memory_space<vmem>>, vector<128x128xf32>
    %cst = arith.constant dense<0.000000e+00> : vector<8x128xf32>
    %2 = tpu.matmul %0, %1, %cst {dimension_numbers = #tpu.dot_dimension_numbers<[1], [0], [0], [1], [0, 0, 1, 1], [], []>} : vector<8x128xf32>, vector<128x128xf32>, vector<8x128xf32> -> vector<8x128xf32>
    %c0_3 = arith.constant 0 : index
    %c0_4 = arith.constant 0 : index
    %3 = vector.load %arg3[%c0_3, %c0_4] : memref<1x128xf32, #tpu.memory_space<vmem>>, vector<1x128xf32>
    %4 = vector.broadcast %3 : vector<1x128xf32> to vector<8x128xf32>
    %5 = arith.addf %2, %4 : vector<8x128xf32>
    %cst_5 = arith.constant 1.000000e+00 : f32
    %6 = vector.broadcast %cst_5 : f32 to vector<8x128xf32>
    %7 = arith.maximumf %5, %6 : vector<8x128xf32>
    %cst_6 = arith.constant 1.000000e+00 : f32
    %8 = vector.broadcast %cst_6 : f32 to vector<8x128xf32>
    %9 = arith.minimumf %7, %8 : vector<8x128xf32>
    %c0_7 = arith.constant 0 : index
    %c0_8 = arith.constant 0 : index
    %10 = vector.load %arg4[%c0_7, %c0_8] : memref<128x64xf32, #tpu.memory_space<vmem>>, vector<128x64xf32>
    %cst_9 = arith.constant dense<0.000000e+00> : vector<8x64xf32>
    %11 = tpu.matmul %9, %10, %cst_9 {dimension_numbers = #tpu.dot_dimension_numbers<[1], [0], [0], [1], [0, 0, 1, 1], [], []>} : vector<8x128xf32>, vector<128x64xf32>, vector<8x64xf32> -> vector<8x64xf32>
    %c0_10 = arith.constant 0 : index
    %c0_11 = arith.constant 0 : index
    %12 = vector.load %arg5[%c0_10, %c0_11] : memref<1x64xf32, #tpu.memory_space<vmem>>, vector<1x64xf32>
    %13 = vector.broadcast %12 : vector<1x64xf32> to vector<8x64xf32>
    %14 = arith.addf %11, %13 : vector<8x64xf32>
    %c0_12 = arith.constant 0 : index
    %c0_13 = arith.constant 0 : index
    %15 = vector.load %arg6[%c0_12, %c0_13] : memref<8x64xf32, #tpu.memory_space<vmem>>, vector<8x64xf32>
    tpu.vector_store %arg6[%c0_12, %c0_13], %14 {strides = array<i32>} : memref<8x64xf32, #tpu.memory_space<vmem>>, vector<8x64xf32>,
    return
  }
  func.func @transform_0(%arg0: i32) -> (i32, i32) {
    %c0_i32 = arith.constant 0 : i32
    %c0_i32_0 = arith.constant 0 : i32
    return %arg0, %c0_i32 : i32, i32
  }
  func.func @transform_1(%arg0: i32) -> (i32, i32) {
    %c0_i32 = arith.constant 0 : i32
    %c0_i32_0 = arith.constant 0 : i32
    %c0_i32_1 = arith.constant 0 : i32
    return %c0_i32, %c0_i32_0 : i32, i32
  }
  func.func @transform_2(%arg0: i32) -> (i32, i32) {
    %c0_i32 = arith.constant 0 : i32
    %c0_i32_0 = arith.constant 0 : i32
    %c0_i32_1 = arith.constant 0 : i32
    return %c0_i32, %c0_i32_0 : i32, i32
  }
  func.func @transform_3(%arg0: i32) -> (i32, i32) {
    %c0_i32 = arith.constant 0 : i32
    %c0_i32_0 = arith.constant 0 : i32
    %c0_i32_1 = arith.constant 0 : i32
    return %c0_i32, %c0_i32_0 : i32, i32
  }
  func.func @transform_4(%arg0: i32) -> (i32, i32) {
    %c0_i32 = arith.constant 0 : i32
    %c0_i32_0 = arith.constant 0 : i32
    %c0_i32_1 = arith.constant 0 : i32
    return %c0_i32, %c0_i32_0 : i32, i32
  }
  func.func @transform_5(%arg0: i32) -> (i32, i32) {
    %c0_i32 = arith.constant 0 : i32
    %c0_i32_0 = arith.constant 0 : i32
    return %arg0, %c0_i32 : i32, i32
  }
}

</mosaic_0001>

<llo_original>
// kernel: tpu_custom_call.1
$region0: #{tpu_custom_call.1}
  #allocation0 [shape = 'u32[]', space=smem, size = 0x4, offset = 0x4, fixed_abs, tag = 'smem constant byte address 0x4 - core index']
  #allocation1 [shape = 'u32[144,128]{1,0:T(1,128)}', space=vmem, size = 0x12000, scoped, tag = 'internal scratch']
  %s0 = inlined_call_operand.vmem [shape: f32[8,128], index: 0, kind: input, shape index: {}]
  %s1 = inlined_call_operand.vmem [shape: f32[128,128], index: 1, kind: input, shape index: {}]
  %s2 = inlined_call_operand.vmem [shape: f32[1,128], index: 2, kind: input, shape index: {}]
  %s3 = inlined_call_operand.vmem [shape: f32[128,64], index: 3, kind: input, shape index: {}]
  %s4 = inlined_call_operand.vmem [shape: f32[1,64], index: 4, kind: input, shape index: {}]
  %s5 = inlined_call_operand.hbm [shape: f32[8,64], index: 5, kind: output, shape index: {}]
  %s6 = sld [smem:[#allocation0]]
  $region30: #{tpu_custom_call.1} parent=0
    _
  %s8 = ssub.s32 1, %s6
  %s9 = scalar_select 0, %s8, %s6
  $region1: #{tpu_custom_call.1} parent=0
    #allocation2 [shape = 'u8[4096]{0}', space=vmem, size = 0x1000, scoped, tag = 'output window, operand 0, single buffered']
    #allocation3 [shape = 's32[1]{0}', space=sflag, size = 0x4, scoped, tag = 'scoped memory for tpu_custom_call.1']
    %10 = vsyncpa [#allocation3], 0
    // Predicated region
    $region2: #{tpu_custom_call.1} parent=1 // pred_check
      _
    $region3: #{tpu_custom_call.1} parent=1 // pred_check_branch
      %12 = sbr.rel (0) target = $region5
    $region4: #{tpu_custom_call.1} parent=1 // pred_region
      _
    $region5: #{tpu_custom_call.1} parent=1 // pred_fallthru
      _
    // Predicated region
    $region6: #{tpu_custom_call.1} parent=1 // pred_check
      _
    $region7: #{tpu_custom_call.1} parent=1 // pred_check_branch
      %14 = sbr.rel (0) target = $region9
    $region8: #{tpu_custom_call.1} parent=1 // pred_region
      _
    $region9: #{tpu_custom_call.1} parent=1 // pred_fallthru
      _
    // Predicated region
    $region10: #{tpu_custom_call.1} parent=1 // pred_check
      _
    $region11: #{tpu_custom_call.1} parent=1 // pred_check_branch
      %16 = sbr.rel (0) target = $region13
    $region12: #{tpu_custom_call.1} parent=1 // pred_region
      _
    $region13: #{tpu_custom_call.1} parent=1 // pred_fallthru
      _
    // Predicated region
    $region14: #{tpu_custom_call.1} parent=1 // pred_check
      _
    $region15: #{tpu_custom_call.1} parent=1 // pred_check_branch
      %18 = sbr.rel (0) target = $region17
    $region16: #{tpu_custom_call.1} parent=1 // pred_region
      _
    $region17: #{tpu_custom_call.1} parent=1 // pred_fallthru
      _
    // Predicated region
    $region18: #{tpu_custom_call.1} parent=1 // pred_check
      _
    $region19: #{tpu_custom_call.1} parent=1 // pred_check_branch
      %20 = sbr.rel (0) target = $region21
    $region20: #{tpu_custom_call.1} parent=1 // pred_region
      _
    $region21: #{tpu_custom_call.1} parent=1 // pred_fallthru
      _
    %v21 = vld [vmem:[%s0] sm:$0xff]
    %v22 = vld [vmem:[%s1] sm:$0xff]
    %v23 = vld [vmem:[%s1 + $0x8] sm:$0xff]
    %v24 = vld [vmem:[%s1 + $0x10] sm:$0xff]
    %v25 = vld [vmem:[%s1 + $0x18] sm:$0xff]
    %v26 = vld [vmem:[%s1 + $0x20] sm:$0xff]
    %v27 = vld [vmem:[%s1 + $0x28] sm:$0xff]
    %v28 = vld [vmem:[%s1 + $0x30] sm:$0xff]
    %v29 = vld [vmem:[%s1 + $0x38] sm:$0xff]
    %v30 = vld [vmem:[%s1 + $0x40] sm:$0xff]
    %v31 = vld [vmem:[%s1 + $0x48] sm:$0xff]
    %v32 = vld [vmem:[%s1 + $0x50] sm:$0xff]
    %v33 = vld [vmem:[%s1 + $0x58] sm:$0xff]
    %v34 = vld [vmem:[%s1 + $0x60] sm:$0xff]
    %v35 = vld [vmem:[%s1 + $0x68] sm:$0xff]
    %v36 = vld [vmem:[%s1 + $0x70] sm:$0xff]
    %v37 = vld [vmem:[%s1 + $0x78] sm:$0xff]
    %v38 = vld [vmem:[%s2] sm:$0x1]
    %v40 = vlaneseq
    %v41 = vshrl.u32 %v40, 7
    %v42 = vsub.s32 0, %v41
    %v43 = vrot.slane %v38, %v42
    %45 = vmatprep.subr.mxu0 0.0
    %46 = vmatpush1.msra.mxu0 %v37
    %47 = vmatprep.subr.mxu0 0.0
    %48 = vmatpush1.msra.mxu0 %v36
    %49 = vmatprep.subr.mxu0 0.0
    %50 = vmatpush1.msra.mxu0 %v35
    %51 = vmatprep.subr.mxu0 0.0
    %52 = vmatpush1.msra.mxu0 %v34
    %53 = vmatprep.subr.mxu0 0.0
    %54 = vmatpush1.msra.mxu0 %v33
    %55 = vmatprep.subr.mxu0 0.0
    %56 = vmatpush1.msra.mxu0 %v32
    %57 = vmatprep.subr.mxu0 0.0
    %58 = vmatpush1.msra.mxu0 %v31
    %59 = vmatprep.subr.mxu0 0.0
    %60 = vmatpush1.msra.mxu0 %v30
    %61 = vmatprep.subr.mxu0 0.0
    %62 = vmatpush1.msra.mxu0 %v29
    %63 = vmatprep.subr.mxu0 0.0
    %64 = vmatpush1.msra.mxu0 %v28
    %65 = vmatprep.subr.mxu0 0.0
    %66 = vmatpush1.msra.mxu0 %v27
    %67 = vmatprep.subr.mxu0 0.0
    %68 = vmatpush1.msra.mxu0 %v26
    %69 = vmatprep.subr.mxu0 0.0
    %70 = vmatpush1.msra.mxu0 %v25
    %71 = vmatprep.subr.mxu0 0.0
    %72 = vmatpush1.msra.mxu0 %v24
    %73 = vmatprep.subr.mxu0 0.0
    %74 = vmatpush1.msra.mxu0 %v23
    %75 = vmatprep.subr.mxu0 0.0
    %76 = vmatpush1.msra.mxu0 %v22
    %77 = vmatprep.subr.mxu0 0.0
    %78 = vmatpush2.msra.mxu0 0.0
    %79 = vmatprep.subr.mxu0 0.0
    %80 = vmatpush2.msra.mxu0 0.0
    %81 = vmatprep.subr.mxu0 0.0
    %82 = vmatpush2.msra.mxu0 0.0
    %83 = vmatprep.subr.mxu0 0.0
    %84 = vmatpush2.msra.mxu0 0.0
    %85 = vmatprep.subr.mxu0 0.0
    %86 = vmatpush2.msra.mxu0 0.0
    %87 = vmatprep.subr.mxu0 0.0
    %88 = vmatpush2.msra.mxu0 0.0
    %89 = vmatprep.subr.mxu0 0.0
    %90 = vmatpush2.msra.mxu0 0.0
    %91 = vmatprep.subr.mxu0 0.0
    %92 = vmatpush2.msra.mxu0 0.0
    %93 = vmatprep.subr.mxu0 0.0
    %94 = vmatpush2.msra.mxu0 0.0
    %95 = vmatprep.subr.mxu0 0.0
    %96 = vmatpush2.msra.mxu0 0.0
    %97 = vmatprep.subr.mxu0 0.0
    %98 = vmatpush2.msra.mxu0 0.0
    %99 = vmatprep.subr.mxu0 0.0
    %100 = vmatpush2.msra.mxu0 0.0
    %101 = vmatprep.subr.mxu0 0.0
    %102 = vmatpush2.msra.mxu0 0.0
    %103 = vmatprep.subr.mxu0 0.0
    %104 = vmatpush2.msra.mxu0 0.0
    %105 = vmatprep.subr.mxu0 0.0
    %106 = vmatpush2.msra.mxu0 0.0
    %107 = vmatprep.subr.mxu0 0.0
    %108 = vmatpush2.msra.mxu0 0.0
    %109 = vmatprep.mubr.f32.mxu0 0.0
    %110 = vmatmul.mubr.f32.gmra.mxu0 %v21
    %v111 = vpop.f32.mrf.mxu0
    %v112 = vadd.f32 %v43, %v111
    %v113 = vpop.f32.mrf.mxu0
    %114 = vdwg.mxu0
    %v115 = vmax.f32 %v112, 1.0
    %v116 = vmin.f32 %v115, 1.0
    %v117 = vld [vmem:[%s3] sm:$0xff]
    %v118 = vld [vmem:[%s3 + $0x8] sm:$0xff]
    %v119 = vld [vmem:[%s3 + $0x10] sm:$0xff]
    %v120 = vld [vmem:[%s3 + $0x18] sm:$0xff]
    %v121 = vld [vmem:[%s3 + $0x20] sm:$0xff]
    %v122 = vld [vmem:[%s3 + $0x28] sm:$0xff]
    %v123 = vld [vmem:[%s3 + $0x30] sm:$0xff]
    %v124 = vld [vmem:[%s3 + $0x38] sm:$0xff]
    %v125 = vld [vmem:[%s3 + $0x40] sm:$0xff]
    %v126 = vld [vmem:[%s3 + $0x48] sm:$0xff]
    %v127 = vld [vmem:[%s3 + $0x50] sm:$0xff]
    %v128 = vld [vmem:[%s3 + $0x58] sm:$0xff]
    %v129 = vld [vmem:[%s3 + $0x60] sm:$0xff]
    %v130 = vld [vmem:[%s3 + $0x68] sm:$0xff]
    %v131 = vld [vmem:[%s3 + $0x70] sm:$0xff]
    %v132 = vld [vmem:[%s3 + $0x78] sm:$0xff]
    %v133 = vld [vmem:[%s4] sm:$0x1]
    %v135 = vlaneseq
    %v136 = vshrl.u32 %v135, 7
    %v137 = vsub.s32 0, %v136
    %v138 = vrot.slane %v133, %v137
    %140 = vmatprep.subr.mxu0 0.0
    %141 = vmatpush1.msra.mxu0 %v132
    %142 = vmatprep.subr.mxu0 0.0
    %143 = vmatpush1.msra.mxu0 %v131
    %144 = vmatprep.subr.mxu0 0.0
    %145 = vmatpush1.msra.mxu0 %v130
    %146 = vmatprep.subr.mxu0 0.0
    %147 = vmatpush1.msra.mxu0 %v129
    %148 = vmatprep.subr.mxu0 0.0
    %149 = vmatpush1.msra.mxu0 %v128
    %150 = vmatprep.subr.mxu0 0.0
    %151 = vmatpush1.msra.mxu0 %v127
    %152 = vmatprep.subr.mxu0 0.0
    %153 = vmatpush1.msra.mxu0 %v126
    %154 = vmatprep.subr.mxu0 0.0
    %155 = vmatpush1.msra.mxu0 %v125
    %156 = vmatprep.subr.mxu0 0.0
    %157 = vmatpush1.msra.mxu0 %v124
    %158 = vmatprep.subr.mxu0 0.0
    %159 = vmatpush1.msra.mxu0 %v123
    %160 = vmatprep.subr.mxu0 0.0
    %161 = vmatpush1.msra.mxu0 %v122
    %162 = vmatprep.subr.mxu0 0.0
    %163 = vmatpush1.msra.mxu0 %v121
    %164 = vmatprep.subr.mxu0 0.0
    %165 = vmatpush1.msra.mxu0 %v120
    %166 = vmatprep.subr.mxu0 0.0
    %167 = vmatpush1.msra.mxu0 %v119
    %168 = vmatprep.subr.mxu0 0.0
    %169 = vmatpush1.msra.mxu0 %v118
    %170 = vmatprep.subr.mxu0 0.0
    %171 = vmatpush1.msra.mxu0 %v117
    %172 = vmatprep.subr.mxu0 0.0
    %173 = vmatpush2.msra.mxu0 0.0
    %174 = vmatprep.subr.mxu0 0.0
    %175 = vmatpush2.msra.mxu0 0.0
    %176 = vmatprep.subr.mxu0 0.0
    %177 = vmatpush2.msra.mxu0 0.0
    %178 = vmatprep.subr.mxu0 0.0
    %179 = vmatpush2.msra.mxu0 0.0
    %180 = vmatprep.subr.mxu0 0.0
    %181 = vmatpush2.msra.mxu0 0.0
    %182 = vmatprep.subr.mxu0 0.0
    %183 = vmatpush2.msra.mxu0 0.0
    %184 = vmatprep.subr.mxu0 0.0
    %185 = vmatpush2.msra.mxu0 0.0
    %186 = vmatprep.subr.mxu0 0.0
    %187 = vmatpush2.msra.mxu0 0.0
    %188 = vmatprep.subr.mxu0 0.0
    %189 = vmatpush2.msra.mxu0 0.0
    %190 = vmatprep.subr.mxu0 0.0
    %191 = vmatpush2.msra.mxu0 0.0
    %192 = vmatprep.subr.mxu0 0.0
    %193 = vmatpush2.msra.mxu0 0.0
    %194 = vmatprep.subr.mxu0 0.0
    %195 = vmatpush2.msra.mxu0 0.0
    %196 = vmatprep.subr.mxu0 0.0
    %197 = vmatpush2.msra.mxu0 0.0
    %198 = vmatprep.subr.mxu0 0.0
    %199 = vmatpush2.msra.mxu0 0.0
    %200 = vmatprep.subr.mxu0 0.0
    %201 = vmatpush2.msra.mxu0 0.0
    %202 = vmatprep.subr.mxu0 0.0
    %203 = vmatpush2.msra.mxu0 0.0
    %204 = vmatprep.mubr.f32.mxu0 0.0
    %205 = vmatmul.mubr.f32.gmra.mxu0 %v116
    %v206 = vpop.f32.mrf.mxu0
    %v207 = vadd.f32 %v138, %v206
    %v208 = vpop.f32.mrf.mxu0
    %209 = vdwg.mxu0
    %vm210 = vcmask 523264
    %211 = vst.msk [vmem:[#allocation2] sm:$0xff] %vm210, %v207
    // Predicated region
    $region22: #{tpu_custom_call.1} parent=1 // pred_check
      _
    $region23: #{tpu_custom_call.1} parent=1 // pred_check_branch
      %213 = sbr.rel (0) target = $region25
    $region24: #{tpu_custom_call.1} parent=1 // pred_region
      %s215 = ssub.s32 128, 128
      %216 = vsyncadd [#allocation3], %s215
      %s218 = sshll.u32 [#allocation2], 4
      %s219 = int_to_ptr.vmem [resolvable:$true] %s218
      %221 = dma.vmem_to_hbm [thread:$0]  %s219, 128, %s5, [#allocation3]
    $region25: #{tpu_custom_call.1} parent=1 // pred_fallthru
      _
    // Predicated region
    $region26: #{tpu_custom_call.1} parent=1 // pred_check
      _
    $region27: #{tpu_custom_call.1} parent=1 // pred_check_branch
      %223 = sbr.rel (0) target = $region29
    $region28: #{tpu_custom_call.1} parent=1 // pred_region
      %224 = dma.done [#allocation3], 128
    $region29: #{tpu_custom_call.1} parent=1 // pred_fallthru
      _
    %225 = vsyncpa [#allocation3], 1

</llo_original>
